<compile_context>
chip_gen: v6e
topology: v6e:2x2x1
jax: 0.10.0
libtpu: 0.0.40
codegen_flags: <defaults>
</compile_context>

<pallas_src>
import numpy as np
import jax
import jax.numpy as jnp
from jax import lax
from jax.experimental import pallas as pl
from jax.experimental.pallas import tpu as pltpu

FILTERS = 256
HIDDEN = 64


# ---------------------------------------------------------------------------
# Pallas kernel: one fused (fwd + rev) bidirectional LSTM layer recurrence.
#   gx_ref : (C, Bt, 8H) bf16   precomputed x-projections + bias, fused
#            per-gate layout [i_f i_r | f_f f_r | g_f g_r | o_f o_r]; the rev
#            half of row t already holds the projection of x[T-1-t].
#   whh_ref: (2H, 8H) bf16      block-diagonal recurrent weights (resident).
#   yf_ref : (C, Bt, H) bf16    forward outputs for this time chunk.
#   yr_ref : (C, Bt, H) bf16    reverse outputs, written at chunk-local row
#                               C-1-j; the out_spec maps this block to time
#                               chunk n_tc-1-tc so global time lines up.
#   h_scr/c_scr: (Bt, 2H) f32   [h_fwd | h_rev] / [c_fwd | c_rev], resident
#                               across the whole time sweep.
# ---------------------------------------------------------------------------
def bilstm_kernel(gx_ref, whh_ref, yf_ref, yr_ref, h_scr, c_scr):
    C = gx_ref.shape[0]          # time-chunk length
    Bt, H2 = h_scr.shape         # H2 = 2H = 128 (one vreg lane width)
    H = H2 // 2
    G = H2                       # gate slab width (fwd + rev) = 128

    tc = pl.program_id(1)

    @pl.when(tc == 0)
    def _init():                 # zero initial states per batch tile
        h_scr[...] = jnp.zeros_like(h_scr)
        c_scr[...] = jnp.zeros_like(c_scr)

    def step(j, carry):
        gx_t = gx_ref[j].astype(jnp.float32)                 # (Bt, 8H)
        h_bf = h_scr[...].astype(jnp.bfloat16)               # (Bt, 2H)
        gates = jnp.dot(h_bf, whh_ref[...],
                        preferred_element_type=jnp.float32) + gx_t   # (Bt, 8H)
        # 128-wide, vreg-aligned gate slabs; each covers [fwd(64) | rev(64)].
        i_g = jax.nn.sigmoid(gates[:, 0 * G:1 * G])
        f_g = jax.nn.sigmoid(gates[:, 1 * G:2 * G])
        g_g = jnp.tanh(gates[:, 2 * G:3 * G])
        o_g = jax.nn.sigmoid(gates[:, 3 * G:4 * G])
        c_new = f_g * c_scr[...] + i_g * g_g
        h_new = o_g * jnp.tanh(c_new)
        c_scr[...] = c_new
        h_scr[...] = h_new
        # Plain (unmasked) chunk-local row stores; no full-T residency and no
        # dynamic global-time address arithmetic on the recurrence chain.
        h_out = h_new.astype(yf_ref.dtype)
        yf_ref[j] = h_out[:, :H]
        yr_ref[C - 1 - j] = h_out[:, H:]
        return carry

    lax.fori_loop(0, C, step, 0)     # unroll=1: keep vreg pressure low at larger Bt


def _vmem_limit_bytes():
    """Generation-aware scoped-VMEM limit (v5e/v6e: 64 MiB, v7x: 32 MiB)."""
    cap = 128 * 1024 * 1024
    try:
        info = pltpu.get_tpu_info()
        cap = int(getattr(info, "vmem_capacity_bytes", cap))
    except Exception:
        pass
    return int(min(64 * 1024 * 1024, cap // 2))


def _pick_tiles(T, B):
    """b_tile targets 32-64 rows (divides B, multiple of 8, and leaves >= 2
    batch blocks when possible so the parallel axis can shard across v7x's
    two TensorCores).  t_chunk <= 32 keeps the gx double-buffer small; the
    per-core VMEM footprint is then a few MiB regardless of T."""
    if B % 8 == 0:
        cands = [bt for bt in (64, 32, 16, 8) if B % bt == 0]
        pref = [bt for bt in cands if B // bt >= 2]
        b_tile = pref[0] if pref else cands[0]
    else:
        b_tile = B               # tiny / odd batch: single (padded) tile
    t_chunk = min(T, 32)
    while T % t_chunk:
        t_chunk -= 1
    return t_chunk, b_tile


def bilstm_layer(gx, whh_cat):
    """gx: (T, B, 8H) bf16 fused x-projections -> (y_fwd, y_rev), each (T, B, H) bf16."""
    T, B, H8 = gx.shape
    H = H8 // 8
    H2 = 2 * H
    t_chunk, b_tile = _pick_tiles(T, B)
    n_tc = T // t_chunk
    grid = (B // b_tile, n_tc)

    cost = pl.CostEstimate(
        flops=2 * T * B * H2 * H8,
        transcendentals=5 * T * B * H2,
        bytes_accessed=int(gx.size) * 2 + 2 * T * B * H * 2 + int(whh_cat.size) * 2,
    )

    return pl.pallas_call(
        bilstm_kernel,
        out_shape=(jax.ShapeDtypeStruct((T, B, H), jnp.bfloat16),
                   jax.ShapeDtypeStruct((T, B, H), jnp.bfloat16)),
        grid_spec=pltpu.PrefetchScalarGridSpec(
            num_scalar_prefetch=0,
            grid=grid,
            in_specs=[
                # gx: pipelined (double-buffered) time chunks per batch tile
                pl.BlockSpec((t_chunk, b_tile, H8), lambda bi, tc: (tc, bi, 0)),
                # recurrent weights: fetched once, resident
                pl.BlockSpec((H2, H8), lambda bi, tc: (0, 0)),
            ],
            out_specs=[
                # forward outputs: chunk tc
                pl.BlockSpec((t_chunk, b_tile, H), lambda bi, tc: (tc, bi, 0)),
                # reverse outputs: mirrored chunk (kernel writes row C-1-j)
                pl.BlockSpec((t_chunk, b_tile, H),
                             lambda bi, tc: (n_tc - 1 - tc, bi, 0)),
            ],
            scratch_shapes=[
                pltpu.VMEM((b_tile, H2), jnp.float32),   # h  [fwd | rev]
                pltpu.VMEM((b_tile, H2), jnp.float32),   # c  [fwd | rev]
            ],
        ),
        compiler_params=pltpu.CompilerParams(
            dimension_semantics=("parallel", "arbitrary"),
            vmem_limit_bytes=_vmem_limit_bytes(),
        ),
        cost_estimate=cost,
    )(gx, whh_cat)


# ---------------------------------------------------------------------------
# Hoisted input projection (plain XLA, one big bf16 matmul with M = T*B).
# Produces the fused per-gate-interleaved layout with the reverse direction's
# time axis already flipped, so the kernel reads one contiguous row per step.
# ---------------------------------------------------------------------------
def _fuse_gates(g, b_cat, T, B, H):
    g = g.reshape(T, B, 2, 4, H)
    gf = g[:, :, 0]                                           # fwd gates at time t
    gr = g[::-1, :, 1]                                        # rev gates at time T-1-t
    gx = jnp.stack([gf, gr], axis=3).reshape(T, B, 8 * H) + b_cat
    return gx.astype(jnp.bfloat16)


def x_projection_input(x_tm, p, H):
    """First layer: dense (T, B, D) input."""
    T, B, _ = x_tm.shape
    g = jnp.einsum("tbd,dg->tbg", x_tm.astype(jnp.bfloat16), p["wih_both"],
                   preferred_element_type=jnp.float32)        # (T, B, 8H) [fwd(4H)|rev(4H)]
    return _fuse_gates(g, p["b_cat"], T, B, H)


def x_projection_split(y_f, y_r, p, H):
    """Later layers: consume the previous layer's split (fwd, rev) halves
    directly - two einsums summed, no re-concat."""
    T, B, _ = y_f.shape
    w = p["wih_both"]                                         # (2H, 8H)
    g = (jnp.einsum("tbh,hg->tbg", y_f, w[:H], preferred_element_type=jnp.float32)
         + jnp.einsum("tbh,hg->tbg", y_r, w[H:], preferred_element_type=jnp.float32))
    return _fuse_gates(g, p["b_cat"], T, B, H)


def lstm_module_forward(x, layers):
    """x: (B, filters*3, T) -> (B, T, 2*HIDDEN). Time-major internally."""
    h = jnp.transpose(x, (2, 0, 1)).astype(jnp.float32)       # one transpose in
    gx = x_projection_input(h, layers[0], HIDDEN)
    y_f, y_r = bilstm_layer(gx, layers[0]["whh_cat"])
    for p in layers[1:]:                                      # remaining 3 bi-layers
        gx = x_projection_split(y_f, y_r, p, HIDDEN)
        y_f, y_r = bilstm_layer(gx, p["whh_cat"])
    y = jnp.concatenate([y_f, y_r], axis=-1).astype(jnp.float32)   # (T, B, 2H)
    return jnp.transpose(y, (1, 0, 2))                        # one transpose out


# ---------------------------------------------------------------------------
# Parameter init (PyTorch-style uniform) + kernel-layout prep.
# ---------------------------------------------------------------------------
def init_params(key, hidden):
    input_sizes = [FILTERS * 3, 2 * hidden, 2 * hidden, 2 * hidden]
    bound = 1.0 / np.sqrt(hidden)
    layers = []
    for d_in in input_sizes:
        dirs = []
        for _ in range(2):  # fwd, rev
            key, k1, k2, k3, k4 = jax.random.split(key, 5)
            wih = jax.random.uniform(k1, (4 * hidden, d_in), jnp.float32, -bound, bound)
            whh = jax.random.uniform(k2, (4 * hidden, hidden), jnp.float32, -bound, bound)
            bih = jax.random.uniform(k3, (4 * hidden,), jnp.float32, -bound, bound)
            bhh = jax.random.uniform(k4, (4 * hidden,), jnp.float32, -bound, bound)
            dirs.append((wih, whh, bih, bhh))
        layers.append(tuple(dirs))
    return layers


def prep_layer(fwd_raw, rev_raw, H):
    wih_f, whh_f, bih_f, bhh_f = fwd_raw
    wih_r, whh_r, bih_r, bhh_r = rev_raw
    # input-projection weights: columns [fwd: i f g o | rev: i f g o]
    wih_both = jnp.concatenate([wih_f.T, wih_r.T], axis=1).astype(jnp.bfloat16)   # (D, 8H)
    # bias in fused per-gate layout [i_f i_r f_f f_r g_f g_r o_f o_r]
    bf = (bih_f + bhh_f).reshape(4, H)
    br = (bih_r + bhh_r).reshape(4, H)
    b_cat = jnp.stack([bf, br], axis=1).reshape(8 * H).astype(jnp.float32)
    # block-diagonal recurrent weights (2H, 8H) in the same fused layout
    wf = whh_f.T.reshape(H, 4, H)
    wr = whh_r.T.reshape(H, 4, H)
    z = jnp.zeros_like(wf)
    top = jnp.stack([wf, z], axis=2).reshape(H, 8 * H)   # fwd h rows -> fwd gate cols
    bot = jnp.stack([z, wr], axis=2).reshape(H, 8 * H)   # rev h rows -> rev gate cols
    whh_cat = jnp.concatenate([top, bot], axis=0).astype(jnp.bfloat16)            # (2H, 8H)
    return {"wih_both": wih_both, "b_cat": b_cat, "whh_cat": whh_cat}


# ---------------------------------------------------------------------------
# Pure-JAX f32 reference (PyTorch semantics) for the correctness check.
# ---------------------------------------------------------------------------
def lstm_dir_ref(x_tbD, wih, whh, bih, bhh):
    H = whh.shape[1]
    B = x_tbD.shape[1]
    wih_t, whh_t, b = wih.T, whh.T, (bih + bhh)[None, :]

    def step(carry, x_t):
        h, c = carry
        gates = x_t @ wih_t + h @ whh_t + b
        i = jax.nn.sigmoid(gates[:, :H])
        f = jax.nn.sigmoid(gates[:, H:2 * H])
        g = jnp.tanh(gates[:, 2 * H:3 * H])
        o = jax.nn.sigmoid(gates[:, 3 * H:])
        c = f * c + i * g
        h = o * jnp.tanh(c)
        return (h, c), h

    init = (jnp.zeros((B, H), jnp.float32), jnp.zeros((B, H), jnp.float32))
    _, ys = lax.scan(step, init, x_tbD)
    return ys


def lstm_module_forward_ref(x, raw_layers):
    h = jnp.transpose(x, (0, 2, 1))
    for (fwd, rev) in raw_layers:
        x_tb = jnp.transpose(h, (1, 0, 2))
        yf = lstm_dir_ref(x_tb, *fwd)
        yr = lstm_dir_ref(x_tb[::-1], *rev)[::-1]
        h = jnp.transpose(jnp.concatenate([yf, yr], axis=-1), (1, 0, 2))
    return h


if __name__ == "__main__":
    key = jax.random.PRNGKey(0)
    k_x, k_p, k_x2 = jax.random.split(key, 3)

    C_in = FILTERS * 3  # 768, fixed by the module definition
    raw = init_params(k_p, HIDDEN)
    prepped = [prep_layer(fwd, rev, HIDDEN) for (fwd, rev) in raw]
    fwd_fn = jax.jit(lambda xx: lstm_module_forward(xx, prepped))

    # --- primary small-shape check (B=2, T=8; single chunk / single batch tile)
    B, T = 2, 8
    x = jax.random.normal(k_x, (B, C_in, T), dtype=jnp.float32)
    out = jax.block_until_ready(fwd_fn(x))
    assert out.shape == (B, T, 2 * HIDDEN), out.shape
    ref = jax.block_until_ready(lstm_module_forward_ref(x, raw))
    # bf16 MXU inputs / bf16 layer outputs (f32 accumulation) -> relaxed tolerance.
    np.testing.assert_allclose(np.asarray(out), np.asarray(ref), atol=4e-2, rtol=4e-2)

    # --- multi-chunk / multi-batch-tile path (grid = (2, 2)); looser tolerance
    #     since bf16 rounding compounds over the longer sequence.
    B2, T2 = 16, 64
    x2 = jax.random.normal(k_x2, (B2, C_in, T2), dtype=jnp.float32)
    out2 = jax.block_until_ready(fwd_fn(x2))
    assert out2.shape == (B2, T2, 2 * HIDDEN), out2.shape
    ref2 = jax.block_until_ready(lstm_module_forward_ref(x2, raw))
    np.testing.assert_allclose(np.asarray(out2), np.asarray(ref2), atol=8e-2, rtol=8e-2)

    print("KERNEL_OK")
</pallas_src>

<mosaic_0001>
module attributes {stable_mosaic.version = 11 : i64} {
  func.func @bilstm_kernel(%arg0: i32, %arg1: i32, %arg2: memref<8x2x512xbf16, #tpu.memory_space<vmem>>, %arg3: memref<128x512xbf16, #tpu.memory_space<vmem>>, %arg4: memref<8x2x64xbf16, #tpu.memory_space<vmem>>, %arg5: memref<8x2x64xbf16, #tpu.memory_space<vmem>>, %arg6: memref<2x128xf32, #tpu.memory_space<vmem>>, %arg7: memref<2x128xf32, #tpu.memory_space<vmem>>) attributes {dimension_semantics = [#tpu.dimension_semantics<parallel>, #tpu.dimension_semantics<arbitrary>], iteration_bounds = array<i64: 1, 1>, scalar_prefetch = 0 : i64, scratch_operands = 2 : i64, tpu.core_type = #tpu.core_type<tc>, window_params = [{transform_indices = @transform_0, window_bounds = array<i64: 8, 2, 512>}, {pipeline_mode = #tpu.pipeline_mode<synchronous>, transform_indices = @transform_1, window_bounds = array<i64: 128, 512>}, {transform_indices = @transform_2, window_bounds = array<i64: 8, 2, 64>}, {transform_indices = @transform_3, window_bounds = array<i64: 8, 2, 64>}]} {
    %c0_i32 = arith.constant 0 : i32
    %0 = arith.cmpi eq, %arg1, %c0_i32 : i32
    %1 = arith.extui %0 : i1 to i32
    %c0_i32_0 = arith.constant 0 : i32
    %2 = arith.cmpi ne, %1, %c0_i32_0 : i32
    scf.if %2 {
      %cst = arith.constant 0.000000e+00 : f32
      %4 = vector.broadcast %cst : f32 to vector<2x128xf32>
      %c0 = arith.constant 0 : index
      %c0_3 = arith.constant 0 : index
      %5 = vector.load %arg6[%c0, %c0_3] : memref<2x128xf32, #tpu.memory_space<vmem>>, vector<2x128xf32>
      tpu.vector_store %arg6[%c0, %c0_3], %4 {strides = array<i32>} : memref<2x128xf32, #tpu.memory_space<vmem>>, vector<2x128xf32>,
      %cst_4 = arith.constant 0.000000e+00 : f32
      %6 = vector.broadcast %cst_4 : f32 to vector<2x128xf32>
      %c0_5 = arith.constant 0 : index
      %c0_6 = arith.constant 0 : index
      %7 = vector.load %arg7[%c0_5, %c0_6] : memref<2x128xf32, #tpu.memory_space<vmem>>, vector<2x128xf32>
      tpu.vector_store %arg7[%c0_5, %c0_6], %6 {strides = array<i32>} : memref<2x128xf32, #tpu.memory_space<vmem>>, vector<2x128xf32>,
    } else {
    }
    %c0_i32_1 = arith.constant 0 : i32
    %c8_i32 = arith.constant 8 : i32
    %3 = arith.addi %c0_i32_1, %c8_i32 : i32
    %c1_i32 = arith.constant 1 : i32
    scf.for %arg8 = %c0_i32_1 to %3 step %c1_i32  : i32 {
      %4 = arith.index_cast %arg8 : i32 to index
      %c0 = arith.constant 0 : index
      %c0_3 = arith.constant 0 : index
      %5 = vector.load %arg2[%4, %c0, %c0_3] : memref<8x2x512xbf16, #tpu.memory_space<vmem>>, vector<1x2x512xbf16>
      %6 = vector.shape_cast %5 : vector<1x2x512xbf16> to vector<2x512xbf16>
      %7 = arith.extf %6 : vector<2x512xbf16> to vector<2x512xf32>
      %c0_4 = arith.constant 0 : index
      %c0_5 = arith.constant 0 : index
      %8 = vector.load %arg6[%c0_4, %c0_5] : memref<2x128xf32, #tpu.memory_space<vmem>>, vector<2x128xf32>
      %9 = arith.truncf %8 : vector<2x128xf32> to vector<2x128xbf16>
      %c0_6 = arith.constant 0 : index
      %c0_7 = arith.constant 0 : index
      %10 = vector.load %arg3[%c0_6, %c0_7] : memref<128x512xbf16, #tpu.memory_space<vmem>>, vector<128x512xbf16>
      %cst = arith.constant dense<0.000000e+00> : vector<2x512xf32>
      %11 = tpu.matmul %9, %10, %cst {dimension_numbers = #tpu.dot_dimension_numbers<[1], [0], [0], [1], [0, 0, 1, 1], [], []>} : vector<2x128xbf16>, vector<128x512xbf16>, vector<2x512xf32> -> vector<2x512xf32>
      %12 = arith.addf %11, %7 : vector<2x512xf32>
      %13 = vector.extract_strided_slice %12 {offsets = [0, 0], sizes = [2, 128], strides = [1, 1]} : vector<2x512xf32> to vector<2x128xf32>
      %14 = arith.negf %13 : vector<2x128xf32>
      %15 = math.exp %14 : vector<2x128xf32>
      %cst_8 = arith.constant 1.000000e+00 : f32
      %16 = vector.broadcast %cst_8 : f32 to vector<2x128xf32>
      %17 = arith.addf %16, %15 : vector<2x128xf32>
      %18 = arith.divf %16, %17 : vector<2x128xf32>
      %19 = vector.extract_strided_slice %12 {offsets = [0, 128], sizes = [2, 128], strides = [1, 1]} : vector<2x512xf32> to vector<2x128xf32>
      %20 = arith.negf %19 : vector<2x128xf32>
      %21 = math.exp %20 : vector<2x128xf32>
      %cst_9 = arith.constant 1.000000e+00 : f32
      %22 = vector.broadcast %cst_9 : f32 to vector<2x128xf32>
      %23 = arith.addf %22, %21 : vector<2x128xf32>
      %24 = arith.divf %22, %23 : vector<2x128xf32>
      %25 = vector.extract_strided_slice %12 {offsets = [0, 256], sizes = [2, 128], strides = [1, 1]} : vector<2x512xf32> to vector<2x128xf32>
      %26 = math.tanh %25 : vector<2x128xf32>
      %27 = vector.extract_strided_slice %12 {offsets = [0, 384], sizes = [2, 128], strides = [1, 1]} : vector<2x512xf32> to vector<2x128xf32>
      %28 = arith.negf %27 : vector<2x128xf32>
      %29 = math.exp %28 : vector<2x128xf32>
      %cst_10 = arith.constant 1.000000e+00 : f32
      %30 = vector.broadcast %cst_10 : f32 to vector<2x128xf32>
      %31 = arith.addf %30, %29 : vector<2x128xf32>
      %32 = arith.divf %30, %31 : vector<2x128xf32>
      %c0_11 = arith.constant 0 : index
      %c0_12 = arith.constant 0 : index
      %33 = vector.load %arg7[%c0_11, %c0_12] : memref<2x128xf32, #tpu.memory_space<vmem>>, vector<2x128xf32>
      %34 = arith.mulf %24, %33 : vector<2x128xf32>
      %35 = arith.mulf %18, %26 : vector<2x128xf32>
      %36 = arith.addf %34, %35 : vector<2x128xf32>
      %37 = math.tanh %36 : vector<2x128xf32>
      %38 = arith.mulf %32, %37 : vector<2x128xf32>
      %c0_13 = arith.constant 0 : index
      %c0_14 = arith.constant 0 : index
      %39 = vector.load %arg7[%c0_13, %c0_14] : memref<2x128xf32, #tpu.memory_space<vmem>>, vector<2x128xf32>
      tpu.vector_store %arg7[%c0_13, %c0_14], %36 {strides = array<i32>} : memref<2x128xf32, #tpu.memory_space<vmem>>, vector<2x128xf32>,
      %c0_15 = arith.constant 0 : index
      %c0_16 = arith.constant 0 : index
      %40 = vector.load %arg6[%c0_15, %c0_16] : memref<2x128xf32, #tpu.memory_space<vmem>>, vector<2x128xf32>
      tpu.vector_store %arg6[%c0_15, %c0_16], %38 {strides = array<i32>} : memref<2x128xf32, #tpu.memory_space<vmem>>, vector<2x128xf32>,
      %41 = arith.truncf %38 : vector<2x128xf32> to vector<2x128xbf16>
      %42 = vector.extract_strided_slice %41 {offsets = [0, 0], sizes = [2, 64], strides = [1, 1]} : vector<2x128xbf16> to vector<2x64xbf16>
      %43 = arith.index_cast %arg8 : i32 to index
      %c0_17 = arith.constant 0 : index
      %c0_18 = arith.constant 0 : index
      %44 = vector.load %arg4[%43, %c0_17, %c0_18] : memref<8x2x64xbf16, #tpu.memory_space<vmem>>, vector<1x2x64xbf16>
      %45 = vector.shape_cast %44 : vector<1x2x64xbf16> to vector<2x64xbf16>
      %46 = vector.shape_cast %42 : vector<2x64xbf16> to vector<1x2x64xbf16>
      tpu.vector_store %arg4[%43, %c0_17, %c0_18], %46 {strides = array<i32>} : memref<8x2x64xbf16, #tpu.memory_space<vmem>>, vector<1x2x64xbf16>,
      %47 = vector.extract_strided_slice %41 {offsets = [0, 64], sizes = [2, 64], strides = [1, 1]} : vector<2x128xbf16> to vector<2x64xbf16>
      %c7_i32 = arith.constant 7 : i32
      %48 = arith.subi %c7_i32, %arg8 : i32
      %49 = arith.index_cast %48 : i32 to index
      %c0_19 = arith.constant 0 : index
      %c0_20 = arith.constant 0 : index
      %50 = vector.load %arg5[%49, %c0_19, %c0_20] : memref<8x2x64xbf16, #tpu.memory_space<vmem>>, vector<1x2x64xbf16>
      %51 = vector.shape_cast %50 : vector<1x2x64xbf16> to vector<2x64xbf16>
      %52 = vector.shape_cast %47 : vector<2x64xbf16> to vector<1x2x64xbf16>
      tpu.vector_store %arg5[%49, %c0_19, %c0_20], %52 {strides = array<i32>} : memref<8x2x64xbf16, #tpu.memory_space<vmem>>, vector<1x2x64xbf16>,
    }
    %c8_i32_2 = arith.constant 8 : i32
    return
  }
  func.func @transform_0(%arg0: i32, %arg1: i32) -> (i32, i32, i32) {
    %c0_i32 = arith.constant 0 : i32
    %c0_i32_0 = arith.constant 0 : i32
    return %arg1, %arg0, %c0_i32 : i32, i32, i32
  }
  func.func @transform_1(%arg0: i32, %arg1: i32) -> (i32, i32) {
    %c0_i32 = arith.constant 0 : i32
    %c0_i32_0 = arith.constant 0 : i32
    %c0_i32_1 = arith.constant 0 : i32
    return %c0_i32, %c0_i32_0 : i32, i32
  }
  func.func @transform_2(%arg0: i32, %arg1: i32) -> (i32, i32, i32) {
    %c0_i32 = arith.constant 0 : i32
    %c0_i32_0 = arith.constant 0 : i32
    return %arg1, %arg0, %c0_i32 : i32, i32, i32
  }
  func.func @transform_3(%arg0: i32, %arg1: i32) -> (i32, i32, i32) {
    %c0_i32 = arith.constant 0 : i32
    %0 = arith.subi %c0_i32, %arg1 : i32
    %c0_i32_0 = arith.constant 0 : i32
    %c0_i32_1 = arith.constant 0 : i32
    return %0, %arg0, %c0_i32_0 : i32, i32, i32
  }
}

</mosaic_0001>

<llo_original>
// kernel: _lambda_.4
$region0: #{_lambda_.4}
  #allocation0 [shape = 'u32[]', space=smem, size = 0x4, offset = 0x4, fixed_abs, tag = 'smem constant byte address 0x4 - core index']
  #allocation1 [shape = 'u32[144,128]{1,0:T(1,128)}', space=vmem, size = 0x12000, scoped, tag = 'internal scratch']
  #allocation2 [shape = 'f32[2,128]{1,0:T(2,128)}', space=vmem, size = 0x400, scoped, tag = 'scratch operand']
  #allocation3 [shape = 'f32[2,128]{1,0:T(2,128)}', space=vmem, size = 0x400, scoped, tag = 'scratch operand']
  %s0 = inlined_call_operand.vmem [shape: bf16[8,2,512], index: 0, kind: input, shape index: {}]
  %s1 = inlined_call_operand.vmem [shape: bf16[128,512], index: 1, kind: input, shape index: {}]
  %s2 = inlined_call_operand.vmem [shape: bf16[8,2,64], index: 2, kind: output, shape index: {0}]
  %s3 = inlined_call_operand.vmem [shape: bf16[8,2,64], index: 3, kind: output, shape index: {1}]
  %4 = xla_tuple %s2, %s3
  %s5 = sld [smem:[#allocation0]]
  $region37: #{_lambda_.4} parent=0
    _
  %s7 = ssub.s32 1, %s5
  %s8 = scalar_select 0, %s7, %s5
  // Predicated region
  $region2: #{_lambda_.4} parent=0 // pred_check
    _
  $region3: #{_lambda_.4} parent=0 // pred_check_branch
    %10 = sbr.rel (0) target = $region5
  $region4: #{_lambda_.4} parent=0 // pred_region
    _
  $region5: #{_lambda_.4} parent=0 // pred_fallthru
    _
  // Predicated region
  $region6: #{_lambda_.4} parent=0 // pred_check
    _
  $region7: #{_lambda_.4} parent=0 // pred_check_branch
    %12 = sbr.rel (0) target = $region9
  $region8: #{_lambda_.4} parent=0 // pred_region
    _
  $region9: #{_lambda_.4} parent=0 // pred_fallthru
    _
  %s13 = ssub.s32 0, 0
  %s14 = smul.u32 8, %s13
  %p15 = scmp.lt.s32.totalorder %s14, 7
  %s16 = scalar_select %p15, %s14, 7
  %s17 = scalar_lea.vmem %s3, %s16
  %s18 = ssub.s32 0, 0
  %s19 = smul.u32 8, %s18
  %p20 = scmp.lt.s32.totalorder %s19, 7
  %s21 = scalar_select %p20, %s19, 7
  %s22 = scalar_lea.vmem %s3, %s21
  %s23 = ssub.s32 0, 0
  %s24 = smul.u32 8, %s23
  %p26 = scmp.eq.s32.totalorder 0, 0
  // Predicated region
  $region10: #{_lambda_.4} parent=0 // pred_check
    %p27 = pneg %p26
  $region11: #{_lambda_.4} parent=0 // pred_check_branch
    %29 = sbr.rel (%p27) target = $region13
  $region12: #{_lambda_.4} parent=0 // pred_region
    %30 = vst [vmem:[#allocation2] sm:$0x3] 0.0
    %31 = vst [vmem:[#allocation3] sm:$0x3] 0.0
  $region13: #{_lambda_.4} parent=0 // pred_fallthru
    _
  loop: start=0, step=1, limit=8
  $region14: #{_lambda_.4} parent=0 // loop_pre_header
    _
  $region15: #{_lambda_.4} parent=0 // loop_header
    %s33 = sphi 0, %s37
    %p34 = scmp.ge.s32.totalorder %s33, 8
  $region16: #{_lambda_.4} parent=0 // loop_header_branch
    %36 = sbr.rel (%p34) target = $region20
  $region17: #{_lambda_.4} parent=0 // loop_body
    %s38 = smul.u32 %s33, 4
    %s39 = scalar_lea.vmem %s0, %s38
    %v40 = vld [vmem:[%s39] sm:$0xf]
    %v41 = vunpack.c.l.bf16 %v40
    %v42 = vld [vmem:[#allocation2] sm:$0x3]
    %v43 = vpack.c.bf16 %v42, %v42
    %v44 = vld [vmem:[%s1] sm:$0xff]
    %v45 = vld [vmem:[%s1 + $0x8] sm:$0xff]
    %v46 = vld [vmem:[%s1 + $0x10] sm:$0xff]
    %v47 = vld [vmem:[%s1 + $0x18] sm:$0xff]
    %v48 = vld [vmem:[%s1 + $0x20] sm:$0xff]
    %v49 = vld [vmem:[%s1 + $0x28] sm:$0xff]
    %v50 = vld [vmem:[%s1 + $0x30] sm:$0xff]
    %v51 = vld [vmem:[%s1 + $0x38] sm:$0xff]
    %v52 = vld [vmem:[%s1 + $0x40] sm:$0xff]
    %v53 = vld [vmem:[%s1 + $0x48] sm:$0xff]
    %v54 = vld [vmem:[%s1 + $0x50] sm:$0xff]
    %v55 = vld [vmem:[%s1 + $0x58] sm:$0xff]
    %v56 = vld [vmem:[%s1 + $0x60] sm:$0xff]
    %v57 = vld [vmem:[%s1 + $0x68] sm:$0xff]
    %v58 = vld [vmem:[%s1 + $0x70] sm:$0xff]
    %v59 = vld [vmem:[%s1 + $0x78] sm:$0xff]
    %v60 = vld [vmem:[%s1 + $0x80] sm:$0xff]
    %v61 = vld [vmem:[%s1 + $0x88] sm:$0xff]
    %v62 = vld [vmem:[%s1 + $0x90] sm:$0xff]
    %v63 = vld [vmem:[%s1 + $0x98] sm:$0xff]
    %v64 = vld [vmem:[%s1 + $0xa0] sm:$0xff]
    %v65 = vld [vmem:[%s1 + $0xa8] sm:$0xff]
    %v66 = vld [vmem:[%s1 + $0xb0] sm:$0xff]
    %v67 = vld [vmem:[%s1 + $0xb8] sm:$0xff]
    %v68 = vld [vmem:[%s1 + $0xc0] sm:$0xff]
    %v69 = vld [vmem:[%s1 + $0xc8] sm:$0xff]
    %v70 = vld [vmem:[%s1 + $0xd0] sm:$0xff]
    %v71 = vld [vmem:[%s1 + $0xd8] sm:$0xff]
    %v72 = vld [vmem:[%s1 + $0xe0] sm:$0xff]
    %v73 = vld [vmem:[%s1 + $0xe8] sm:$0xff]
    %v74 = vld [vmem:[%s1 + $0xf0] sm:$0xff]
    %v75 = vld [vmem:[%s1 + $0xf8] sm:$0xff]
    %v108 = vunpack.c.l.b16 %v44
    %v109 = vunpack.c.h.b16 %v44
    %v110 = vunpack.c.l.b16 %v45
    %v111 = vunpack.c.h.b16 %v45
    %v112 = vunpack.c.l.b16 %v46
    %v113 = vunpack.c.h.b16 %v46
    %v114 = vunpack.c.l.b16 %v47
    %v115 = vunpack.c.h.b16 %v47
    %v116 = vunpack.c.l.b16 %v48
    %v117 = vunpack.c.h.b16 %v48
    %v118 = vunpack.c.l.b16 %v49
    %v119 = vunpack.c.h.b16 %v49
    %v120 = vunpack.c.l.b16 %v50
    %v121 = vunpack.c.h.b16 %v50
    %v122 = vunpack.c.l.b16 %v51
    %v123 = vunpack.c.h.b16 %v51
    %v124 = vunpack.c.l.b16 %v52
    %v125 = vunpack.c.h.b16 %v52
    %v126 = vunpack.c.l.b16 %v53
    %v127 = vunpack.c.h.b16 %v53
    %v128 = vunpack.c.l.b16 %v54
    %v129 = vunpack.c.h.b16 %v54
    %v130 = vunpack.c.l.b16 %v55
    %v131 = vunpack.c.h.b16 %v55
    %v132 = vunpack.c.l.b16 %v56
    %v133 = vunpack.c.h.b16 %v56
    %v134 = vunpack.c.l.b16 %v57
    %v135 = vunpack.c.h.b16 %v57
    %v136 = vunpack.c.l.b16 %v58
    %v137 = vunpack.c.h.b16 %v58
    %v138 = vunpack.c.l.b16 %v59
    %v139 = vunpack.c.h.b16 %v59
    %v140 = vunpack.c.l.b16 %v60
    %v141 = vunpack.c.h.b16 %v60
    %v142 = vunpack.c.l.b16 %v61
    %v143 = vunpack.c.h.b16 %v61
    %v144 = vunpack.c.l.b16 %v62
    %v145 = vunpack.c.h.b16 %v62
    %v146 = vunpack.c.l.b16 %v63
    %v147 = vunpack.c.h.b16 %v63
    %v148 = vunpack.c.l.b16 %v64
    %v149 = vunpack.c.h.b16 %v64
    %v150 = vunpack.c.l.b16 %v65
    %v151 = vunpack.c.h.b16 %v65
    %v152 = vunpack.c.l.b16 %v66
    %v153 = vunpack.c.h.b16 %v66
    %v154 = vunpack.c.l.b16 %v67
    %v155 = vunpack.c.h.b16 %v67
    %v156 = vunpack.c.l.b16 %v68
    %v157 = vunpack.c.h.b16 %v68
    %v158 = vunpack.c.l.b16 %v69
    %v159 = vunpack.c.h.b16 %v69
    %v160 = vunpack.c.l.b16 %v70
    %v161 = vunpack.c.h.b16 %v70
    %v162 = vunpack.c.l.b16 %v71
    %v163 = vunpack.c.h.b16 %v71
    %v164 = vunpack.c.l.b16 %v72
    %v165 = vunpack.c.h.b16 %v72
    %v166 = vunpack.c.l.b16 %v73
    %v167 = vunpack.c.h.b16 %v73
    %v168 = vunpack.c.l.b16 %v74
    %v169 = vunpack.c.h.b16 %v74
    %v170 = vunpack.c.l.b16 %v75
    %v171 = vunpack.c.h.b16 %v75
    %v172 = vpack.c.b16 %v112, %v108
    %v173 = vpack.c.b16 %v113, %v109
    %v174 = vpack.c.b16 %v114, %v110
    %v175 = vpack.c.b16 %v115, %v111
    %v176 = vpack.c.b16 %v120, %v116
    %v177 = vpack.c.b16 %v121, %v117
    %v178 = vpack.c.b16 %v122, %v118
    %v179 = vpack.c.b16 %v123, %v119
    %v180 = vpack.c.b16 %v128, %v124
    %v181 = vpack.c.b16 %v129, %v125
    %v182 = vpack.c.b16 %v130, %v126
    %v183 = vpack.c.b16 %v131, %v127
    %v184 = vpack.c.b16 %v136, %v132
    %v185 = vpack.c.b16 %v137, %v133
    %v186 = vpack.c.b16 %v138, %v134
    %v187 = vpack.c.b16 %v139, %v135
    %v188 = vpack.c.b16 %v144, %v140
    %v189 = vpack.c.b16 %v145, %v141
    %v190 = vpack.c.b16 %v146, %v142
    %v191 = vpack.c.b16 %v147, %v143
    %v192 = vpack.c.b16 %v152, %v148
    %v193 = vpack.c.b16 %v153, %v149
    %v194 = vpack.c.b16 %v154, %v150
    %v195 = vpack.c.b16 %v155, %v151
    %v196 = vpack.c.b16 %v160, %v156
    %v197 = vpack.c.b16 %v161, %v157
    %v198 = vpack.c.b16 %v162, %v158
    %v199 = vpack.c.b16 %v163, %v159
    %v200 = vpack.c.b16 %v168, %v164
    %v201 = vpack.c.b16 %v169, %v165
    %v202 = vpack.c.b16 %v170, %v166
    %v203 = vpack.c.b16 %v171, %v167
    %v237 = vcombine.high %v41, %v41
    %v239 = vunpack.c.l.s4 1983009808
    %v240 = vunpack.c.0.s8 %v239
    %v241 = vlaneseq
    %v242 = vshrl.u32 %v241, 7
    %v243 = vsub.s32 %v240, %v242
    %v244 = vrot.slane %v41, %v243
    %v246 = vunpack.c.l.s4 1983009808
    %v247 = vunpack.c.0.s8 %v246
    %v248 = vlaneseq
    %v249 = vshrl.u32 %v248, 7
    %v250 = vsub.s32 %v247, %v249
    %v251 = vrot.slane %v237, %v250
    %v252 = vcombine.high %v244, %v244
    %v253 = vcombine.high %v251, %v251
    %258 = vmatprep.subr.bf16.mxu0 %v201
    %259 = vmatpush1.bf16.msra.mxu0 %v200
    %260 = vmatprep.subr.bf16.mxu0 %v197
    %261 = vmatpush1.bf16.msra.mxu0 %v196
    %262 = vmatprep.subr.bf16.mxu0 %v193
    %263 = vmatpush1.bf16.msra.mxu0 %v192
    %264 = vmatprep.subr.bf16.mxu0 %v189
    %265 = vmatpush1.bf16.msra.mxu0 %v188
    %266 = vmatprep.subr.bf16.mxu0 %v185
    %267 = vmatpush1.bf16.msra.mxu0 %v184
    %268 = vmatprep.subr.bf16.mxu0 %v181
    %269 = vmatpush1.bf16.msra.mxu0 %v180
    %270 = vmatprep.subr.bf16.mxu0 %v177
    %271 = vmatpush1.bf16.msra.mxu0 %v176
    %272 = vmatprep.subr.bf16.mxu0 %v173
    %273 = vmatpush1.bf16.msra.mxu0 %v172
    %274 = vmatprep.subr.bf16.mxu0 0
    %275 = vmatpush2.bf16.msra.mxu0 0
    %276 = vmatprep.subr.bf16.mxu0 0
    %277 = vmatpush2.bf16.msra.mxu0 0
    %278 = vmatprep.subr.bf16.mxu0 0
    %279 = vmatpush2.bf16.msra.mxu0 0
    %280 = vmatprep.subr.bf16.mxu0 0
    %281 = vmatpush2.bf16.msra.mxu0 0
    %282 = vmatprep.subr.bf16.mxu0 0
    %283 = vmatpush2.bf16.msra.mxu0 0
    %284 = vmatprep.subr.bf16.mxu0 0
    %285 = vmatpush2.bf16.msra.mxu0 0
    %286 = vmatprep.subr.bf16.mxu0 0
    %287 = vmatpush2.bf16.msra.mxu0 0
    %288 = vmatprep.subr.bf16.mxu0 0
    %289 = vmatpush2.bf16.msra.mxu0 0
    %290 = vmatprep.mubr.bf16.mxu0 0
    %291 = vmatmul.mubr.bf16.gmra.mxu0 %v43
    %v292 = vpop.f32.mrf.mxu0
    %v293 = vadd.f32 %v244, %v292
    %v294 = vpop.f32.mrf.mxu0
    %v295 = vadd.f32 %v252, %v294
    %v296 = vpop.f32.mrf.mxu0
    %v297 = vpop.f32.mrf.mxu0
    %298 = vdwg.mxu0
    %299 = vmatprep.subr.bf16.mxu0 %v203
    %300 = vmatpush1.bf16.msra.mxu0 %v202
    %301 = vmatprep.subr.bf16.mxu0 %v199
    %302 = vmatpush1.bf16.msra.mxu0 %v198
    %303 = vmatprep.subr.bf16.mxu0 %v195
    %304 = vmatpush1.bf16.msra.mxu0 %v194
    %305 = vmatprep.subr.bf16.mxu0 %v191
    %306 = vmatpush1.bf16.msra.mxu0 %v190
    %307 = vmatprep.subr.bf16.mxu0 %v187
    %308 = vmatpush1.bf16.msra.mxu0 %v186
    %309 = vmatprep.subr.bf16.mxu0 %v183
    %310 = vmatpush1.bf16.msra.mxu0 %v182
    %311 = vmatprep.subr.bf16.mxu0 %v179
    %312 = vmatpush1.bf16.msra.mxu0 %v178
    %313 = vmatprep.subr.bf16.mxu0 %v175
    %314 = vmatpush1.bf16.msra.mxu0 %v174
    %315 = vmatprep.subr.bf16.mxu0 0
    %316 = vmatpush2.bf16.msra.mxu0 0
    %317 = vmatprep.subr.bf16.mxu0 0
    %318 = vmatpush2.bf16.msra.mxu0 0
    %319 = vmatprep.subr.bf16.mxu0 0
    %320 = vmatpush2.bf16.msra.mxu0 0
    %321 = vmatprep.subr.bf16.mxu0 0
    %322 = vmatpush2.bf16.msra.mxu0 0
    %323 = vmatprep.subr.bf16.mxu0 0
    %324 = vmatpush2.bf16.msra.mxu0 0
    %325 = vmatprep.subr.bf16.mxu0 0
    %326 = vmatpush2.bf16.msra.mxu0 0
    %327 = vmatprep.subr.bf16.mxu0 0
    %328 = vmatpush2.bf16.msra.mxu0 0
    %329 = vmatprep.subr.bf16.mxu0 0
    %330 = vmatpush2.bf16.msra.mxu0 0
    %331 = vmatprep.mubr.bf16.mxu0 0
    %332 = vmatmul.mubr.bf16.gmra.mxu0 %v43
    %v333 = vpop.f32.mrf.mxu0
    %v334 = vadd.f32 %v251, %v333
    %v335 = vpop.f32.mrf.mxu0
    %v336 = vadd.f32 %v253, %v335
    %v337 = vpop.f32.mrf.mxu0
    %v338 = vpop.f32.mrf.mxu0
    %339 = vdwg.mxu0
    %v340 = vxor.u32 %v293, 2147483648
    %v341 = vmul.f32 %v340, 1.442695
    %v342 = vpow.pop %v341
    %v343 = vadd.f32 %v342, 1.0
    %v344 = vrcp.pop %v343
    %v345 = vmul.f32 1.0, %v344
    %v346 = vxor.u32 %v295, 2147483648
    %v347 = vmul.f32 %v346, 1.442695
    %v348 = vpow.pop %v347
    %v349 = vadd.f32 %v348, 1.0
    %v350 = vrcp.pop %v349
    %v351 = vmul.f32 1.0, %v350
    %v352 = vtanh.pop %v334
    %v353 = vxor.u32 %v336, 2147483648
    %v354 = vmul.f32 %v353, 1.442695
    %v355 = vpow.pop %v354
    %v356 = vadd.f32 %v355, 1.0
    %v357 = vrcp.pop %v356
    %v358 = vmul.f32 1.0, %v357
    %v359 = vld [vmem:[#allocation3] sm:$0x3]
    %v360 = vmul.f32 %v351, %v359
    %v361 = vmul.f32 %v345, %v352
    %v362 = vadd.f32 %v360, %v361
    %v363 = vtanh.pop %v362
    %v364 = vmul.f32 %v358, %v363
    %365 = vst [vmem:[#allocation3] sm:$0x3] %v362
    %366 = vst [vmem:[#allocation2] sm:$0x3] %v364
    %v367 = vpack.c.bf16 %v364, %v364
    %s368 = scalar_lea.vmem %s2, %s33
    %vm369 = vcmask 516096
    %370 = vst.msk [vmem:[%s368] sm:$0x1] %vm369, %v367
    %s371 = ssub.s32 7, %s33
    %v374 = vunpack.c.l.s4 1966171168
    %v375 = vunpack.c.0.s8 %v374
    %v376 = vlaneseq
    %v377 = vshrl.u32 %v376, 7
    %v378 = vsub.s32 %v375, %v377
    %v379 = vrot.slane %v367, %v378
    %v381 = vunpack.c.l.s4 1966171168
    %v382 = vunpack.c.0.s8 %v381
    %v383 = vlaneseq
    %v384 = vshrl.u32 %v383, 7
    %v385 = vsub.s32 %v382, %v384
    %v386 = vrot.slane %v379, %v385
    %387 = vrot.lane.b32.xlu0 %v386, 64
    %v388 = vpop.permute.xlu0 %387
    %s390 = scalar_lea.vmem %s22, %s371
    %391 = vst.msk [vmem:[%s390] sm:$0x1] %vm369, %v388
  $region18: #{_lambda_.4} parent=0 // loop_footer
    %s37 = sadd.s32 1, %s33
  $region19: #{_lambda_.4} parent=0 // loop_footer_branch
    %32 = sbr.rel target = $region15
  $region20: #{_lambda_.4} parent=0 // loop_exit
    _
  %s392 = ssub.s32 0, 0
  %s393 = smul.u32 8, %s392
  %p394 = scmp.lt.s32.totalorder %s393, 7
  %s395 = scalar_select %p394, %s393, 7
  %s396 = scalar_lea.vmem %s3, %s395
  // Predicated region
  $region21: #{_lambda_.4} parent=0 // pred_check
    _
  $region22: #{_lambda_.4} parent=0 // pred_check_branch
    %398 = sbr.rel (0) target = $region24
  $region23: #{_lambda_.4} parent=0 // pred_region
    _
  $region24: #{_lambda_.4} parent=0 // pred_fallthru
    _
  // Predicated region
  $region25: #{_lambda_.4} parent=0 // pred_check
    _
  $region26: #{_lambda_.4} parent=0 // pred_check_branch
    %400 = sbr.rel (0) target = $region28
  $region27: #{_lambda_.4} parent=0 // pred_region
    %s401 = ssub.s32 0, 0
    %s402 = smul.u32 8, %s401
  $region28: #{_lambda_.4} parent=0 // pred_fallthru
    _
  // Predicated region
  $region29: #{_lambda_.4} parent=0 // pred_check
    _
  $region30: #{_lambda_.4} parent=0 // pred_check_branch
    %404 = sbr.rel (0) target = $region32
  $region31: #{_lambda_.4} parent=0 // pred_region
    _
  $region32: #{_lambda_.4} parent=0 // pred_fallthru
    _
  // Predicated region
  $region33: #{_lambda_.4} parent=0 // pred_check
    _
  $region34: #{_lambda_.4} parent=0 // pred_check_branch
    %406 = sbr.rel (0) target = $region36
  $region35: #{_lambda_.4} parent=0 // pred_region
    %s407 = ssub.s32 0, 0
    %s408 = smul.u32 8, %s407
    %p409 = scmp.lt.s32.totalorder %s408, 7
    %s410 = scalar_select %p409, %s408, 7
    %s411 = scalar_lea.vmem %s3, %s410
  $region36: #{_lambda_.4} parent=0 // pred_fallthru
    _

</llo_original>
